<compile_context>
chip_gen: v7x
topology: tpu7x:2x2x1
jax: 0.10.0
libtpu: 0.0.40
codegen_flags: <defaults>
</compile_context>

<pallas_src>
import jax
import jax.numpy as jnp
from jax.experimental import pallas as pl
from jax.experimental.pallas import tpu as pltpu


def _round_up(n, m):
    return ((n + m - 1) // m) * m


def _vmem_capacity_bytes():
    """Physical VMEM per core; conservative fallback if the query fails."""
    try:
        info = pltpu.get_tpu_info()
        cap = getattr(info, "vmem_capacity_bytes", None)
        if cap:
            return int(cap)
    except Exception:
        pass
    return 64 << 20  # v7x per-TensorCore VMEM (most restrictive generation)


def _pad2(a, rows, cols, dtype):
    """Cast + (only if needed) zero-pad a 2-D array to (rows, cols)."""
    r, c = a.shape
    a = a.astype(dtype)
    if (r, c) == (rows, cols):
        return a                      # aligned: no extra HBM round-trip
    return jnp.zeros((rows, cols), dtype).at[:r, :c].set(a)


def _pad_row(b, cols):
    """Bias as a (1, cols) f32 row, padded only if needed."""
    b = b.astype(jnp.float32).reshape(1, -1)
    if b.shape[1] == cols:
        return b
    return jnp.zeros((1, cols), jnp.float32).at[:, : b.shape[1]].set(b)


# --------------------------------------------------------------------------
# Kernels
# --------------------------------------------------------------------------
def _mlp_head_resident_kernel(x_ref, w1_ref, b1_ref, w2_ref, b2_ref,
                              w3_ref, b3_ref, o_ref):
    """One batch tile, all weights VMEM-resident: Linear->ReLU x2 -> Linear."""
    x = x_ref[...]                                      # (TB, Dp) bf16

    h1 = jnp.dot(x, w1_ref[...], preferred_element_type=jnp.float32)
    h1 = jnp.maximum(h1 + b1_ref[...], 0.0).astype(x.dtype)
    # TODO(synk): training-mode nn.Dropout(p) would mask here via
    # pltpu.prng_seed / pltpu.prng_random_bits; eval-mode dropout is identity.

    h2 = jnp.dot(h1, w2_ref[...], preferred_element_type=jnp.float32)
    h2 = jnp.maximum(h2 + b2_ref[...], 0.0).astype(x.dtype)

    out = jnp.dot(h2, w3_ref[...], preferred_element_type=jnp.float32)
    o_ref[...] = (out + b3_ref[...]).astype(o_ref.dtype)


def _mlp_head_streamed_kernel(x_ref, w1_ref, b1_ref, w2_ref, b2_ref,
                              w3_ref, b3_ref, o_ref, h1_scr, acc_scr):
    """Large-head path: W2 columns / W3 rows streamed over grid axis 1."""
    k = pl.program_id(1)

    @pl.when(k == 0)
    def _():
        x = x_ref[...]                                  # (TB, Dp) bf16
        h1 = jnp.dot(x, w1_ref[...], preferred_element_type=jnp.float32)
        h1 = jnp.maximum(h1 + b1_ref[...], 0.0)
        h1_scr[...] = h1.astype(h1_scr.dtype)           # cache layer-1 output
        acc_scr[...] = jnp.zeros_like(acc_scr)

    # Layer-2 column tile + its layer-3 partial product.
    h2 = jnp.dot(h1_scr[...], w2_ref[...], preferred_element_type=jnp.float32)
    h2 = jnp.maximum(h2 + b2_ref[...], 0.0).astype(h1_scr.dtype)
    acc_scr[...] += jnp.dot(h2, w3_ref[...], preferred_element_type=jnp.float32)

    @pl.when(k == pl.num_programs(1) - 1)
    def _():
        o_ref[...] = (acc_scr[...] + b3_ref[...]).astype(o_ref.dtype)


# --------------------------------------------------------------------------
# Wrapper
# --------------------------------------------------------------------------
def classification_head(x, w1, b1, w2, b2, w3, b3, *, block_b=256,
                        block_n=512, param_dtype=jnp.bfloat16,
                        out_dtype=jnp.float32, force_streamed=False):
    """x: [B, D]; w*: [in, out]; b*: [out]. Returns logits [B, C] (out_dtype).

    out_dtype=jnp.bfloat16 halves output writeback bytes when C is tiny and
    padded to 128 lanes; default f32 matches the PyTorch module.
    """
    B, D = x.shape
    H = w1.shape[1]
    C = w3.shape[1]

    # Lane-dense padding targets (no-op for already-aligned production dims).
    Dp = _round_up(D, 128)
    Hp = _round_up(H, 128)
    Cp = _round_up(C, 128)

    # Batch tiling; guarantee >= 2 grid steps when B > 8 so the "parallel"
    # batch axis can feed both v7x TensorCores.
    TB = min(block_b, _round_up(B, 8))
    if B > 8 and _round_up(B, TB) // TB < 2:
        TB = _round_up((B + 1) // 2, 8)
    Bp = _round_up(B, TB)
    nb = Bp // TB

    xp = _pad2(x, Bp, Dp, param_dtype)
    w1p = _pad2(w1, Dp, Hp, param_dtype)
    w2p = _pad2(w2, Hp, Hp, param_dtype)
    w3p = _pad2(w3, Hp, Cp, param_dtype)
    b1p = _pad_row(b1, Hp)
    b2p = _pad_row(b2, Hp)
    b3p = _pad_row(b3, Cp)

    itemsize = jnp.dtype(param_dtype).itemsize
    out_itemsize = jnp.dtype(out_dtype).itemsize
    cap = _vmem_capacity_bytes()

    cost = pl.CostEstimate(
        flops=2 * Bp * (Dp * Hp + Hp * Hp + Hp * Cp),
        transcendentals=0,
        bytes_accessed=(itemsize * (Bp * Dp + Dp * Hp + Hp * Hp + Hp * Cp)
                        + 4 * (2 * Hp + Cp) + out_itemsize * Bp * Cp),
    )

    # Resident-path footprint: weights single-buffered (pl.Buffered(1)),
    # x / out double-buffered, plus f32 h1/h2 temporaries.
    need_resident = (
        itemsize * (Dp * Hp + Hp * Hp + Hp * Cp)
        + 4 * (2 * Hp + Cp)
        + 2 * itemsize * TB * Dp
        + 2 * out_itemsize * TB * Cp
        + 4 * TB * Hp * 2
    )
    use_resident = (not force_streamed) and need_resident <= cap - (16 << 20)

    if use_resident:
        vmem_limit = int(min(max(need_resident + (8 << 20), 32 << 20), cap))
        resident = lambda shape: pl.BlockSpec(          # noqa: E731
            shape, lambda i: (0, 0), pipeline_mode=pl.Buffered(1))

        out_padded = pl.pallas_call(
            _mlp_head_resident_kernel,
            out_shape=jax.ShapeDtypeStruct((Bp, Cp), out_dtype),
            grid_spec=pltpu.PrefetchScalarGridSpec(
                num_scalar_prefetch=0,
                grid=(nb,),
                in_specs=[
                    # x: tiled over batch, default double-buffering so the
                    # next tile's DMA hides under this tile's matmuls.
                    pl.BlockSpec((TB, Dp), lambda i: (i, 0)),
                    resident((Dp, Hp)), resident((1, Hp)),   # W1, b1
                    resident((Hp, Hp)), resident((1, Hp)),   # W2, b2
                    resident((Hp, Cp)), resident((1, Cp)),   # W3, b3
                ],
                out_specs=pl.BlockSpec((TB, Cp), lambda i: (i, 0)),
            ),
            compiler_params=pltpu.CompilerParams(
                dimension_semantics=("parallel",),           # megacore on v7x
                vmem_limit_bytes=vmem_limit,
            ),
            cost_estimate=cost,
        )(xp, w1p, b1p, w2p, b2p, w3p, b3p)
    else:
        # ---- streamed layer-2/3 path --------------------------------------
        tn = _round_up(min(block_n, Hp), 128)
        while Hp % tn != 0:
            tn -= 128
        nk = Hp // tn

        need_streamed = (
            itemsize * Dp * Hp + 4 * (Hp + Cp)           # W1, b1, b3 resident
            + 2 * itemsize * (Hp * tn + tn * Cp)         # W2/W3 tiles (dbl-buf)
            + 2 * 4 * tn                                 # b2 tile (dbl-buf)
            + 2 * itemsize * TB * Dp                     # x (dbl-buf)
            + 2 * out_itemsize * TB * Cp                 # out (dbl-buf)
            + itemsize * TB * Hp + 4 * TB * Cp           # h1 / acc scratch
            + 4 * TB * max(Hp, tn)                       # f32 temporaries
        )
        if need_streamed > cap - (8 << 20):
            raise ValueError(
                f"streamed path still needs ~{need_streamed >> 20} MiB VMEM "
                f"(capacity {cap >> 20} MiB); reduce block_b/block_n")
        vmem_limit = int(min(max(need_streamed + (8 << 20), 32 << 20), cap))

        single = lambda shape: pl.BlockSpec(             # noqa: E731
            shape, lambda i, k: (0, 0), pipeline_mode=pl.Buffered(1))

        out_padded = pl.pallas_call(
            _mlp_head_streamed_kernel,
            out_shape=jax.ShapeDtypeStruct((Bp, Cp), out_dtype),
            grid_spec=pltpu.PrefetchScalarGridSpec(
                num_scalar_prefetch=0,
                grid=(nb, nk),
                in_specs=[
                    pl.BlockSpec((TB, Dp), lambda i, k: (i, 0)),   # x
                    single((Dp, Hp)),                              # W1 resident
                    single((1, Hp)),                               # b1 resident
                    pl.BlockSpec((Hp, tn), lambda i, k: (0, k)),   # W2 col tile
                    pl.BlockSpec((1, tn), lambda i, k: (0, k)),    # b2 tile
                    pl.BlockSpec((tn, Cp), lambda i, k: (k, 0)),   # W3 row tile
                    single((1, Cp)),                               # b3 resident
                ],
                out_specs=pl.BlockSpec((TB, Cp), lambda i, k: (i, 0)),
                scratch_shapes=[
                    pltpu.VMEM((TB, Hp), param_dtype),   # cached layer-1 out
                    pltpu.VMEM((TB, Cp), jnp.float32),   # layer-3 accumulator
                ],
            ),
            compiler_params=pltpu.CompilerParams(
                dimension_semantics=("parallel", "arbitrary"),
                vmem_limit_bytes=vmem_limit,
            ),
            cost_estimate=cost,
        )(xp, w1p, b1p, w2p, b2p, w3p, b3p)

    if (Bp, Cp) != (B, C):
        out_padded = out_padded[:B, :C]
    return out_padded


# --------------------------------------------------------------------------
# Params / reference / self-test
# --------------------------------------------------------------------------
def init_params(key, input_dim, num_classes, mlp_ratio=1, dtype=jnp.float32):
    """Deterministic synthetic params matching the PyTorch module's shapes."""
    hidden = input_dim * mlp_ratio
    ks = jax.random.split(key, 6)
    # Stored as [in, out] (transposed relative to torch's [out, in]).
    w1 = jax.random.normal(ks[0], (input_dim, hidden), dtype) / jnp.sqrt(input_dim)
    b1 = jax.random.normal(ks[1], (hidden,), dtype) * 0.01
    w2 = jax.random.normal(ks[2], (hidden, hidden), dtype) / jnp.sqrt(hidden)
    b2 = jax.random.normal(ks[3], (hidden,), dtype) * 0.01
    w3 = jax.random.normal(ks[4], (hidden, num_classes), dtype) / jnp.sqrt(hidden)
    b3 = jax.random.normal(ks[5], (num_classes,), dtype) * 0.01
    return w1, b1, w2, b2, w3, b3


def _reference(x, w1, b1, w2, b2, w3, b3):
    h1 = jnp.maximum(x @ w1 + b1, 0.0)
    h2 = jnp.maximum(h1 @ w2 + b2, 0.0)
    return h2 @ w3 + b3


if __name__ == "__main__":
    key = jax.random.PRNGKey(0)
    k_x, k_p = jax.random.split(key)

    # ---- Test 1: resident-weight path (typical small head) ---------------
    B, D, C, R = 24, 32, 4, 2          # batch, input_dim, num_classes, ratio
    x = jax.random.normal(k_x, (B, D), jnp.float32)
    params = init_params(k_p, D, C, mlp_ratio=R)

    out = jax.block_until_ready(classification_head(x, *params))
    ref = _reference(x, *params)
    assert out.shape == (B, C), out.shape
    err = jnp.max(jnp.abs(out - ref))
    # bf16 MXU operands with f32 accumulation -> loose tolerance vs f32 ref.
    assert jnp.allclose(out, ref, atol=5e-2, rtol=5e-2), (
        f"resident path mismatch: max abs err {err:.3e}")

    # ---- Test 2: streamed layer-2/3 path (forced at toy size) ------------
    # block_n=128 with H = 64*4 = 256 gives 2 K-steps, exercising the
    # pl.when init / accumulate / finalize sequence used for v7x large heads.
    B2, D2, C2, R2 = 24, 64, 10, 4
    x2 = jax.random.normal(k_x, (B2, D2), jnp.float32)
    params2 = init_params(jax.random.PRNGKey(1), D2, C2, mlp_ratio=R2)

    out2 = jax.block_until_ready(
        classification_head(x2, *params2, block_n=128, force_streamed=True))
    ref2 = _reference(x2, *params2)
    assert out2.shape == (B2, C2), out2.shape
    err2 = jnp.max(jnp.abs(out2 - ref2))
    assert jnp.allclose(out2, ref2, atol=5e-2, rtol=5e-2), (
        f"streamed path mismatch: max abs err {err2:.3e}")

    print("KERNEL_OK")
</pallas_src>

<mosaic_0001>
module attributes {stable_mosaic.version = 11 : i64} {
  func.func @_mlp_head_resident_kernel(%arg0: i32, %arg1: memref<16x128xbf16, #tpu.memory_space<vmem>>, %arg2: memref<128x128xbf16, #tpu.memory_space<vmem>>, %arg3: memref<1x128xf32, #tpu.memory_space<vmem>>, %arg4: memref<128x128xbf16, #tpu.memory_space<vmem>>, %arg5: memref<1x128xf32, #tpu.memory_space<vmem>>, %arg6: memref<128x128xbf16, #tpu.memory_space<vmem>>, %arg7: memref<1x128xf32, #tpu.memory_space<vmem>>, %arg8: memref<16x128xf32, #tpu.memory_space<vmem>>) attributes {dimension_semantics = [#tpu.dimension_semantics<parallel>], iteration_bounds = array<i64: 2>, scalar_prefetch = 0 : i64, scratch_operands = 0 : i64, tpu.core_type = #tpu.core_type<tc>, window_params = [{transform_indices = @transform_0, window_bounds = array<i64: 16, 128>}, {pipeline_mode = #tpu.pipeline_mode<synchronous>, transform_indices = @transform_1, window_bounds = array<i64: 128, 128>}, {pipeline_mode = #tpu.pipeline_mode<synchronous>, transform_indices = @transform_2, window_bounds = array<i64: 1, 128>}, {pipeline_mode = #tpu.pipeline_mode<synchronous>, transform_indices = @transform_3, window_bounds = array<i64: 128, 128>}, {pipeline_mode = #tpu.pipeline_mode<synchronous>, transform_indices = @transform_4, window_bounds = array<i64: 1, 128>}, {pipeline_mode = #tpu.pipeline_mode<synchronous>, transform_indices = @transform_5, window_bounds = array<i64: 128, 128>}, {pipeline_mode = #tpu.pipeline_mode<synchronous>, transform_indices = @transform_6, window_bounds = array<i64: 1, 128>}, {transform_indices = @transform_7, window_bounds = array<i64: 16, 128>}]} {
    %c0 = arith.constant 0 : index
    %c0_0 = arith.constant 0 : index
    %0 = vector.load %arg1[%c0, %c0_0] : memref<16x128xbf16, #tpu.memory_space<vmem>>, vector<16x128xbf16>
    %c0_1 = arith.constant 0 : index
    %c0_2 = arith.constant 0 : index
    %1 = vector.load %arg2[%c0_1, %c0_2] : memref<128x128xbf16, #tpu.memory_space<vmem>>, vector<128x128xbf16>
    %cst = arith.constant dense<0.000000e+00> : vector<16x128xf32>
    %2 = tpu.matmul %0, %1, %cst {dimension_numbers = #tpu.dot_dimension_numbers<[1], [0], [0], [1], [0, 0, 1, 1], [], []>} : vector<16x128xbf16>, vector<128x128xbf16>, vector<16x128xf32> -> vector<16x128xf32>
    %c0_3 = arith.constant 0 : index
    %c0_4 = arith.constant 0 : index
    %3 = vector.load %arg3[%c0_3, %c0_4] : memref<1x128xf32, #tpu.memory_space<vmem>>, vector<1x128xf32>
    %4 = vector.broadcast %3 : vector<1x128xf32> to vector<16x128xf32>
    %5 = arith.addf %2, %4 : vector<16x128xf32>
    %cst_5 = arith.constant 0.000000e+00 : f32
    %6 = vector.broadcast %cst_5 : f32 to vector<16x128xf32>
    %7 = arith.maximumf %5, %6 : vector<16x128xf32>
    %8 = arith.truncf %7 : vector<16x128xf32> to vector<16x128xbf16>
    %c0_6 = arith.constant 0 : index
    %c0_7 = arith.constant 0 : index
    %9 = vector.load %arg4[%c0_6, %c0_7] : memref<128x128xbf16, #tpu.memory_space<vmem>>, vector<128x128xbf16>
    %cst_8 = arith.constant dense<0.000000e+00> : vector<16x128xf32>
    %10 = tpu.matmul %8, %9, %cst_8 {dimension_numbers = #tpu.dot_dimension_numbers<[1], [0], [0], [1], [0, 0, 1, 1], [], []>} : vector<16x128xbf16>, vector<128x128xbf16>, vector<16x128xf32> -> vector<16x128xf32>
    %c0_9 = arith.constant 0 : index
    %c0_10 = arith.constant 0 : index
    %11 = vector.load %arg5[%c0_9, %c0_10] : memref<1x128xf32, #tpu.memory_space<vmem>>, vector<1x128xf32>
    %12 = vector.broadcast %11 : vector<1x128xf32> to vector<16x128xf32>
    %13 = arith.addf %10, %12 : vector<16x128xf32>
    %cst_11 = arith.constant 0.000000e+00 : f32
    %14 = vector.broadcast %cst_11 : f32 to vector<16x128xf32>
    %15 = arith.maximumf %13, %14 : vector<16x128xf32>
    %16 = arith.truncf %15 : vector<16x128xf32> to vector<16x128xbf16>
    %c0_12 = arith.constant 0 : index
    %c0_13 = arith.constant 0 : index
    %17 = vector.load %arg6[%c0_12, %c0_13] : memref<128x128xbf16, #tpu.memory_space<vmem>>, vector<128x128xbf16>
    %cst_14 = arith.constant dense<0.000000e+00> : vector<16x128xf32>
    %18 = tpu.matmul %16, %17, %cst_14 {dimension_numbers = #tpu.dot_dimension_numbers<[1], [0], [0], [1], [0, 0, 1, 1], [], []>} : vector<16x128xbf16>, vector<128x128xbf16>, vector<16x128xf32> -> vector<16x128xf32>
    %c0_15 = arith.constant 0 : index
    %c0_16 = arith.constant 0 : index
    %19 = vector.load %arg7[%c0_15, %c0_16] : memref<1x128xf32, #tpu.memory_space<vmem>>, vector<1x128xf32>
    %20 = vector.broadcast %19 : vector<1x128xf32> to vector<16x128xf32>
    %21 = arith.addf %18, %20 : vector<16x128xf32>
    %c0_17 = arith.constant 0 : index
    %c0_18 = arith.constant 0 : index
    %22 = vector.load %arg8[%c0_17, %c0_18] : memref<16x128xf32, #tpu.memory_space<vmem>>, vector<16x128xf32>
    tpu.vector_store %arg8[%c0_17, %c0_18], %21 {strides = array<i32>} : memref<16x128xf32, #tpu.memory_space<vmem>>, vector<16x128xf32>,
    return
  }
  func.func @transform_0(%arg0: i32) -> (i32, i32) {
    %c0_i32 = arith.constant 0 : i32
    %c0_i32_0 = arith.constant 0 : i32
    return %arg0, %c0_i32 : i32, i32
  }
  func.func @transform_1(%arg0: i32) -> (i32, i32) {
    %c0_i32 = arith.constant 0 : i32
    %c0_i32_0 = arith.constant 0 : i32
    %c0_i32_1 = arith.constant 0 : i32
    return %c0_i32, %c0_i32_0 : i32, i32
  }
  func.func @transform_2(%arg0: i32) -> (i32, i32) {
    %c0_i32 = arith.constant 0 : i32
    %c0_i32_0 = arith.constant 0 : i32
    %c0_i32_1 = arith.constant 0 : i32
    return %c0_i32, %c0_i32_0 : i32, i32
  }
  func.func @transform_3(%arg0: i32) -> (i32, i32) {
    %c0_i32 = arith.constant 0 : i32
    %c0_i32_0 = arith.constant 0 : i32
    %c0_i32_1 = arith.constant 0 : i32
    return %c0_i32, %c0_i32_0 : i32, i32
  }
  func.func @transform_4(%arg0: i32) -> (i32, i32) {
    %c0_i32 = arith.constant 0 : i32
    %c0_i32_0 = arith.constant 0 : i32
    %c0_i32_1 = arith.constant 0 : i32
    return %c0_i32, %c0_i32_0 : i32, i32
  }
  func.func @transform_5(%arg0: i32) -> (i32, i32) {
    %c0_i32 = arith.constant 0 : i32
    %c0_i32_0 = arith.constant 0 : i32
    %c0_i32_1 = arith.constant 0 : i32
    return %c0_i32, %c0_i32_0 : i32, i32
  }
  func.func @transform_6(%arg0: i32) -> (i32, i32) {
    %c0_i32 = arith.constant 0 : i32
    %c0_i32_0 = arith.constant 0 : i32
    %c0_i32_1 = arith.constant 0 : i32
    return %c0_i32, %c0_i32_0 : i32, i32
  }
  func.func @transform_7(%arg0: i32) -> (i32, i32) {
    %c0_i32 = arith.constant 0 : i32
    %c0_i32_0 = arith.constant 0 : i32
    return %arg0, %c0_i32 : i32, i32
  }
}

</mosaic_0001>

<llo_original>
// kernel: tpu_custom_call.1
$region0: #{tpu_custom_call.1}
  #allocation0 [shape = 'u32[]', space=smem, size = 0x4, offset = 0x4, fixed_abs, tag = 'smem constant byte address 0x4 - core index']
  #allocation1 [shape = 'u32[144,128]{1,0:T(1,128)}', space=vmem, size = 0x12000, scoped, tag = 'internal scratch']
  %s0 = inlined_call_operand.hbm [shape: bf16[32,128], index: 0, kind: input, shape index: {}]
  %s1 = inlined_call_operand.hbm [shape: bf16[128,128], index: 1, kind: input, shape index: {}]
  %s2 = inlined_call_operand.vmem [shape: f32[1,128], index: 2, kind: input, shape index: {}]
  %s3 = inlined_call_operand.hbm [shape: bf16[128,128], index: 3, kind: input, shape index: {}]
  %s4 = inlined_call_operand.vmem [shape: f32[1,128], index: 4, kind: input, shape index: {}]
  %s5 = inlined_call_operand.hbm [shape: bf16[128,128], index: 5, kind: input, shape index: {}]
  %s6 = inlined_call_operand.vmem [shape: f32[1,128], index: 6, kind: input, shape index: {}]
  %s7 = inlined_call_operand.hbm [shape: f32[32,128], index: 7, kind: output, shape index: {}]
  %s8 = sld [smem:[#allocation0]]
  $region77: #{tpu_custom_call.1} parent=0
    _
  %s10 = ssub.s32 1, %s8
  %s11 = scalar_select 0, %s10, %s8
  $region1: #{tpu_custom_call.1} parent=0
    #allocation2 [shape = 'u8[8192]{0}', space=vmem, size = 0x2000, scoped, tag = 'input window, operand 0']
    #allocation3 [shape = 's32[2]{0}', space=sflag, size = 0x8, scoped, tag = 'scoped memory for tpu_custom_call.1']
    #allocation4 [shape = 's32[2]{0}', space=sflag, size = 0x8, scoped, tag = 'scoped memory for tpu_custom_call.1']
    #allocation5 [shape = 'u8[32768]{0}', space=vmem, size = 0x8000, scoped, tag = 'input window, operand 1, single buffered']
    #allocation6 [shape = 's32[1]{0}', space=sflag, size = 0x4, scoped, tag = 'scoped memory for tpu_custom_call.1']
    #allocation7 [shape = 'u8[32768]{0}', space=vmem, size = 0x8000, scoped, tag = 'input window, operand 3, single buffered']
    #allocation8 [shape = 'u8[32768]{0}', space=vmem, size = 0x8000, scoped, tag = 'input window, operand 5, single buffered']
    #allocation9 [shape = 's32[1]{0}', space=sflag, size = 0x4, scoped, tag = 'scoped memory for tpu_custom_call.1']
    #allocation10 [shape = 'u8[16384]{0}', space=vmem, size = 0x4000, scoped, tag = 'output window, operand 0']
    %12 = vsyncpa [#allocation3], 0
    %s13 = scalar_lea.sflag [#allocation3], 1
    %14 = vsyncpa %s13, 0
    %15 = vsyncpa [#allocation6], 0
    %16 = vsyncpa [#allocation9], 0
    %17 = vsyncpa [#allocation4], 0
    %s18 = scalar_lea.sflag [#allocation4], 1
    %19 = vsyncpa %s18, 0
    loop: start=0, step=1, limit=4
    $region2: #{tpu_custom_call.1} parent=1 // loop_pre_header
      _
    $region3: #{tpu_custom_call.1} parent=1 // loop_header
      %s21 = sphi 0, %s25
      %p22 = scmp.ge.s32.totalorder %s21, 4
      %s31 = sphi 0, %s33
      %s34 = sphi 0, %s31
      %s35 = sphi 0, %s34
      %s51 = sphi 0, %s35
      %s55 = sphi 0, %s55
      %s57 = sphi 0, %s55
      %s58 = sphi 0, %s57
      %s72 = sphi 0, %s58
      %s76 = sphi 0, %s76
      %s78 = sphi 0, %s76
      %s79 = sphi 0, %s78
      %s93 = sphi 0, %s79
      %s97 = sphi 0, %s97
      %s99 = sphi 0, %s97
      %s100 = sphi 0, %s99
      %s114 = sphi 0, %s100
      %s118 = sphi 0, %s118
      %s120 = sphi 0, %s118
      %s121 = sphi 0, %s120
      %s135 = sphi 0, %s121
      %s139 = sphi 0, %s139
      %s141 = sphi 0, %s139
      %s142 = sphi 0, %s141
      %s156 = sphi 0, %s142
      %s160 = sphi 0, %s160
      %s162 = sphi 0, %s160
      %s163 = sphi 0, %s162
      %s177 = sphi 0, %s163
      %s183 = sphi 0, %s185
      %s186 = sphi 0, %s183
      %s187 = sphi 0, %s186
      %s203 = sphi 0, %s187
    $region4: #{tpu_custom_call.1} parent=1 // loop_header_branch
      %24 = sbr.rel (%p22) target = $region8
    $region5: #{tpu_custom_call.1} parent=1 // loop_body
      %s26 = ssub.s32 %s21, 1
      %s27 = ssub.s32 %s21, 2
      %s28 = sadd.s32 %s21, 1
      %s29 = ssub.s32 %s21, %s28
      %p30 = scmp.eq.s32.totalorder %s29, 0
      %s32 = sadd.s32 %s31, 1
      %s33 = scalar_select %p30, %s31, %s32
      %p36 = pneg %p30
      %p37 = scmp.eq.s32.totalorder %s21, 1
      %p38 = por %p36, %p37
      %p39 = scmp.ne.s32.totalorder %s31, %s34
      %p40 = scmp.eq.s32.totalorder %s21, 0
      %p41 = por %p39, %p40
      %p42 = scmp.ne.s32.totalorder %s31, %s34
      %p43 = scmp.eq.s32.totalorder %s26, 1
      %p44 = por %p42, %p43
      %p45 = scmp.ne.s32.totalorder %s34, %s35
      %p46 = scmp.eq.s32.totalorder %s26, 0
      %p47 = por %p45, %p46
      %p48 = scmp.ne.s32.totalorder %s34, %s35
      %p49 = scmp.eq.s32.totalorder %s27, 1
      %p50 = por %p48, %p49
      %p52 = scmp.ne.s32.totalorder %s35, %s51
      %p53 = scmp.eq.s32.totalorder %s27, 0
      %p54 = por %p52, %p53
      %s56 = sadd.s32 %s55, 1
      %p59 = scmp.eq.s32.totalorder %s21, 1
      %p60 = scmp.ne.s32.totalorder %s55, %s57
      %p61 = scmp.eq.s32.totalorder %s21, 0
      %p62 = por %p60, %p61
      %p63 = scmp.ne.s32.totalorder %s55, %s57
      %p64 = scmp.eq.s32.totalorder %s26, 1
      %p65 = por %p63, %p64
      %p66 = scmp.ne.s32.totalorder %s57, %s58
      %p67 = scmp.eq.s32.totalorder %s26, 0
      %p68 = por %p66, %p67
      %p69 = scmp.ne.s32.totalorder %s57, %s58
      %p70 = scmp.eq.s32.totalorder %s27, 1
      %p71 = por %p69, %p70
      %p73 = scmp.ne.s32.totalorder %s58, %s72
      %p74 = scmp.eq.s32.totalorder %s27, 0
      %p75 = por %p73, %p74
      %s77 = sadd.s32 %s76, 1
      %p80 = scmp.eq.s32.totalorder %s21, 1
      %p81 = scmp.ne.s32.totalorder %s76, %s78
      %p82 = scmp.eq.s32.totalorder %s21, 0
      %p83 = por %p81, %p82
      %p84 = scmp.ne.s32.totalorder %s76, %s78
      %p85 = scmp.eq.s32.totalorder %s26, 1
      %p86 = por %p84, %p85
      %p87 = scmp.ne.s32.totalorder %s78, %s79
      %p88 = scmp.eq.s32.totalorder %s26, 0
      %p89 = por %p87, %p88
      %p90 = scmp.ne.s32.totalorder %s78, %s79
      %p91 = scmp.eq.s32.totalorder %s27, 1
      %p92 = por %p90, %p91
      %p94 = scmp.ne.s32.totalorder %s79, %s93
      %p95 = scmp.eq.s32.totalorder %s27, 0
      %p96 = por %p94, %p95
      %s98 = sadd.s32 %s97, 1
      %p101 = scmp.eq.s32.totalorder %s21, 1
      %p102 = scmp.ne.s32.totalorder %s97, %s99
      %p103 = scmp.eq.s32.totalorder %s21, 0
      %p104 = por %p102, %p103
      %p105 = scmp.ne.s32.totalorder %s97, %s99
      %p106 = scmp.eq.s32.totalorder %s26, 1
      %p107 = por %p105, %p106
      %p108 = scmp.ne.s32.totalorder %s99, %s100
      %p109 = scmp.eq.s32.totalorder %s26, 0
      %p110 = por %p108, %p109
      %p111 = scmp.ne.s32.totalorder %s99, %s100
      %p112 = scmp.eq.s32.totalorder %s27, 1
      %p113 = por %p111, %p112
      %p115 = scmp.ne.s32.totalorder %s100, %s114
      %p116 = scmp.eq.s32.totalorder %s27, 0
      %p117 = por %p115, %p116
      %s119 = sadd.s32 %s118, 1
      %p122 = scmp.eq.s32.totalorder %s21, 1
      %p123 = scmp.ne.s32.totalorder %s118, %s120
      %p124 = scmp.eq.s32.totalorder %s21, 0
      %p125 = por %p123, %p124
      %p126 = scmp.ne.s32.totalorder %s118, %s120
      %p127 = scmp.eq.s32.totalorder %s26, 1
      %p128 = por %p126, %p127
      %p129 = scmp.ne.s32.totalorder %s120, %s121
      %p130 = scmp.eq.s32.totalorder %s26, 0
      %p131 = por %p129, %p130
      %p132 = scmp.ne.s32.totalorder %s120, %s121
      %p133 = scmp.eq.s32.totalorder %s27, 1
      %p134 = por %p132, %p133
      %p136 = scmp.ne.s32.totalorder %s121, %s135
      %p137 = scmp.eq.s32.totalorder %s27, 0
      %p138 = por %p136, %p137
      %s140 = sadd.s32 %s139, 1
      %p143 = scmp.eq.s32.totalorder %s21, 1
      %p144 = scmp.ne.s32.totalorder %s139, %s141
      %p145 = scmp.eq.s32.totalorder %s21, 0
      %p146 = por %p144, %p145
      %p147 = scmp.ne.s32.totalorder %s139, %s141
      %p148 = scmp.eq.s32.totalorder %s26, 1
      %p149 = por %p147, %p148
      %p150 = scmp.ne.s32.totalorder %s141, %s142
      %p151 = scmp.eq.s32.totalorder %s26, 0
      %p152 = por %p150, %p151
      %p153 = scmp.ne.s32.totalorder %s141, %s142
      %p154 = scmp.eq.s32.totalorder %s27, 1
      %p155 = por %p153, %p154
      %p157 = scmp.ne.s32.totalorder %s142, %s156
      %p158 = scmp.eq.s32.totalorder %s27, 0
      %p159 = por %p157, %p158
      %s161 = sadd.s32 %s160, 1
      %p164 = scmp.eq.s32.totalorder %s21, 1
      %p165 = scmp.ne.s32.totalorder %s160, %s162
      %p166 = scmp.eq.s32.totalorder %s21, 0
      %p167 = por %p165, %p166
      %p168 = scmp.ne.s32.totalorder %s160, %s162
      %p169 = scmp.eq.s32.totalorder %s26, 1
      %p170 = por %p168, %p169
      %p171 = scmp.ne.s32.totalorder %s162, %s163
      %p172 = scmp.eq.s32.totalorder %s26, 0
      %p173 = por %p171, %p172
      %p174 = scmp.ne.s32.totalorder %s162, %s163
      %p175 = scmp.eq.s32.totalorder %s27, 1
      %p176 = por %p174, %p175
      %p178 = scmp.ne.s32.totalorder %s163, %s177
      %p179 = scmp.eq.s32.totalorder %s27, 0
      %p180 = por %p178, %p179
      %s181 = ssub.s32 %s21, %s28
      %p182 = scmp.eq.s32.totalorder %s181, 0
      %s184 = sadd.s32 %s183, 1
      %s185 = scalar_select %p182, %s183, %s184
      %p188 = pneg %p182
      %p189 = scmp.eq.s32.totalorder %s21, 1
      %p190 = por %p188, %p189
      %p191 = scmp.ne.s32.totalorder %s183, %s186
      %p192 = scmp.eq.s32.totalorder %s21, 0
      %p193 = por %p191, %p192
      %p194 = scmp.ne.s32.totalorder %s183, %s186
      %p195 = scmp.eq.s32.totalorder %s26, 1
      %p196 = por %p194, %p195
      %p197 = scmp.ne.s32.totalorder %s186, %s187
      %p198 = scmp.eq.s32.totalorder %s26, 0
      %p199 = por %p197, %p198
      %p200 = scmp.ne.s32.totalorder %s186, %s187
      %p201 = scmp.eq.s32.totalorder %s27, 1
      %p202 = por %p200, %p201
      %p204 = scmp.ne.s32.totalorder %s187, %s203
      %p205 = scmp.eq.s32.totalorder %s27, 0
      %p206 = por %p204, %p205
      %p207 = scmp.le.s32.totalorder 1, %s21
      %p208 = scmp.lt.s32.totalorder %s21, 3
      %p209 = pnand %p207, %p208
      %p210 = pneg %p209
      // Predicated region
      $region9: #{tpu_custom_call.1} parent=5 // pred_check
        _
      $region10: #{tpu_custom_call.1} parent=5 // pred_check_branch
        %212 = sbr.rel (%p209) target = $region12
      $region11: #{tpu_custom_call.1} parent=5 // pred_region
        %s213 = ssub.s32 %s21, 1
        // Predicated region
        $region13: #{tpu_custom_call.1} parent=11 // pred_check
          %p214 = pneg %p68
        $region14: #{tpu_custom_call.1} parent=11 // pred_check_branch
          %216 = sbr.rel (%p214) target = $region16
        $region15: #{tpu_custom_call.1} parent=11 // pred_region
          %s218 = ssub.s32 1024, 1024
          %219 = vsyncadd [#allocation6], %s218
          %s220 = sshll.u32 [#allocation5], 4
          %s221 = int_to_ptr.vmem [resolvable:$true] %s220
          %226 = dma.hbm_to_vmem [thread:$0]  %s1, 1024, %s221, [#allocation6], 64, 64, 4
        $region16: #{tpu_custom_call.1} parent=11 // pred_fallthru
          _
        // Predicated region
        $region17: #{tpu_custom_call.1} parent=11 // pred_check
          %p227 = pneg %p89
        $region18: #{tpu_custom_call.1} parent=11 // pred_check_branch
          %229 = sbr.rel (%p227) target = $region20
        $region19: #{tpu_custom_call.1} parent=11 // pred_region
          _
        $region20: #{tpu_custom_call.1} parent=11 // pred_fallthru
          _
        // Predicated region
        $region21: #{tpu_custom_call.1} parent=11 // pred_check
          %p230 = pneg %p110
        $region22: #{tpu_custom_call.1} parent=11 // pred_check_branch
          %232 = sbr.rel (%p230) target = $region24
        $region23: #{tpu_custom_call.1} parent=11 // pred_region
          %s234 = ssub.s32 1024, 1024
          %235 = vsyncadd [#allocation6], %s234
          %s236 = sshll.u32 [#allocation7], 4
          %s237 = int_to_ptr.vmem [resolvable:$true] %s236
          %242 = dma.hbm_to_vmem [thread:$0]  %s3, 1024, %s237, [#allocation6], 64, 64, 4
        $region24: #{tpu_custom_call.1} parent=11 // pred_fallthru
          _
        // Predicated region
        $region25: #{tpu_custom_call.1} parent=11 // pred_check
          %p243 = pneg %p131
        $region26: #{tpu_custom_call.1} parent=11 // pred_check_branch
          %245 = sbr.rel (%p243) target = $region28
        $region27: #{tpu_custom_call.1} parent=11 // pred_region
          _
        $region28: #{tpu_custom_call.1} parent=11 // pred_fallthru
          _
        // Predicated region
        $region29: #{tpu_custom_call.1} parent=11 // pred_check
          %p246 = pneg %p152
        $region30: #{tpu_custom_call.1} parent=11 // pred_check_branch
          %248 = sbr.rel (%p246) target = $region32
        $region31: #{tpu_custom_call.1} parent=11 // pred_region
          %s250 = ssub.s32 1024, 1024
          %251 = vsyncadd [#allocation9], %s250
          %s252 = sshll.u32 [#allocation8], 4
          %s253 = int_to_ptr.vmem [resolvable:$true] %s252
          %258 = dma.hbm_to_vmem [thread:$0]  %s5, 1024, %s253, [#allocation9], 64, 64, 4
        $region32: #{tpu_custom_call.1} parent=11 // pred_fallthru
          _
        // Predicated region
        $region33: #{tpu_custom_call.1} parent=11 // pred_check
          %p259 = pneg %p173
        $region34: #{tpu_custom_call.1} parent=11 // pred_check_branch
          %261 = sbr.rel (%p259) target = $region36
        $region35: #{tpu_custom_call.1} parent=11 // pred_region
          _
        $region36: #{tpu_custom_call.1} parent=11 // pred_fallthru
          _
      $region12: #{tpu_custom_call.1} parent=5 // pred_fallthru
        _
      %p262 = scmp.lt.s32.totalorder %s21, 2
      // Predicated region
      $region37: #{tpu_custom_call.1} parent=5 // pred_check
        %p263 = pneg %p262
      $region38: #{tpu_custom_call.1} parent=5 // pred_check_branch
        %265 = sbr.rel (%p263) target = $region40
      $region39: #{tpu_custom_call.1} parent=5 // pred_region
        // Predicated region
        $region41: #{tpu_custom_call.1} parent=39 // pred_check
          %p266 = pneg %p41
        $region42: #{tpu_custom_call.1} parent=39 // pred_check_branch
          %268 = sbr.rel (%p266) target = $region44
        $region43: #{tpu_custom_call.1} parent=39 // pred_region
          %s269 = sand.u32 %s31, 1
          %s270 = scalar_lea.sflag [#allocation3], %s269
          %s271 = sand.u32 %s31, 1
          %s272 = smul.addr %s271, 8
          %s273 = scalar_lea.vmem [#allocation2], %s272
          %s274 = smul.u32 2, %s21
          %s276 = ssub.s32 128, 128
          %277 = vsyncadd %s270, %s276
          %s278 = smul.addr %s274, 64
          %s279 = scalar_lea.hbm %s0, %s278
          %s280 = sshll.u32 %s273, 4
          %s281 = int_to_ptr.vmem [resolvable:$true] %s280
          %286 = dma.hbm_to_vmem [thread:$0]  %s279, 128, %s281, %s270, 64, 64, 4
        $region44: #{tpu_custom_call.1} parent=39 // pred_fallthru
          _
      $region40: #{tpu_custom_call.1} parent=5 // pred_fallthru
        _
      %p287 = scmp.le.s32.totalorder 1, %s21
      %p288 = scmp.lt.s32.totalorder %s21, 3
      %p289 = pnand %p287, %p288
      %p290 = pneg %p289
      // Predicated region
      $region45: #{tpu_custom_call.1} parent=5 // pred_check
        _
      $region46: #{tpu_custom_call.1} parent=5 // pred_check_branch
        %292 = sbr.rel (%p289) target = $region48
      $region47: #{tpu_custom_call.1} parent=5 // pred_region
        %s293 = ssub.s32 %s21, 1
        %s294 = sand.u32 %s34, 1
        %s295 = scalar_lea.sflag [#allocation3], %s294
        %s296 = sand.u32 %s34, 1
        %s297 = smul.addr %s296, 8
        %s298 = scalar_lea.vmem [#allocation2], %s297
        // Predicated region
        $region49: #{tpu_custom_call.1} parent=47 // pred_check
          %p299 = pneg %p47
        $region50: #{tpu_custom_call.1} parent=47 // pred_check_branch
          %301 = sbr.rel (%p299) target = $region52
        $region51: #{tpu_custom_call.1} parent=47 // pred_region
          %302 = dma.done %s295, 128
        $region52: #{tpu_custom_call.1} parent=47 // pred_fallthru
          _
        // Predicated region
        $region53: #{tpu_custom_call.1} parent=47 // pred_check
          %p303 = pneg %p68
        $region54: #{tpu_custom_call.1} parent=47 // pred_check_branch
          %305 = sbr.rel (%p303) target = $region56
        $region55: #{tpu_custom_call.1} parent=47 // pred_region
          %306 = dma.done [#allocation6], 1024
        $region56: #{tpu_custom_call.1} parent=47 // pred_fallthru
          _
        // Predicated region
        $region57: #{tpu_custom_call.1} parent=47 // pred_check
          %p307 = pneg %p110
        $region58: #{tpu_custom_call.1} parent=47 // pred_check_branch
          %309 = sbr.rel (%p307) target = $region60
        $region59: #{tpu_custom_call.1} parent=47 // pred_region
          %310 = dma.done [#allocation6], 1024
        $region60: #{tpu_custom_call.1} parent=47 // pred_fallthru
          _
        // Predicated region
        $region61: #{tpu_custom_call.1} parent=47 // pred_check
          %p311 = pneg %p152
        $region62: #{tpu_custom_call.1} parent=47 // pred_check_branch
          %313 = sbr.rel (%p311) target = $region64
        $region63: #{tpu_custom_call.1} parent=47 // pred_region
          %314 = dma.done [#allocation9], 1024
        $region64: #{tpu_custom_call.1} parent=47 // pred_fallthru
          _
        %s315 = sand.u32 %s34, 1
        %s316 = scalar_lea.sflag [#allocation3], %s315
        %s317 = sand.u32 %s34, 1
        %s318 = smul.addr %s317, 8
        %s319 = scalar_lea.vmem [#allocation2], %s318
        %p320 = pneg %p47
        %p321 = pneg %p44
        %p322 = pneg %p68
        %p323 = pneg %p65
        %p324 = pneg %p89
        %p325 = pneg %p86
        %p326 = pneg %p110
        %p327 = pneg %p107
        %p328 = pneg %p131
        %p329 = pneg %p128
        %p330 = pneg %p152
        %p331 = pneg %p149
        %p332 = pneg %p173
        %p333 = pneg %p170
        %p334 = pneg %p199
        %p335 = pneg %p196
        %s336 = sand.u32 %s186, 1
        %s337 = scalar_lea.sflag [#allocation4], %s336
        %s338 = sand.u32 %s186, 1
        %s339 = smul.addr %s338, 16
        %s340 = scalar_lea.vmem [#allocation10], %s339
        %s341 = smul.u32 2, %s26
        %s342 = smul.u32 2, %s26
        %v344 = vld [vmem:[%s298] sm:$0xf]
        %v345 = vld [vmem:[%s298 + $0x4] sm:$0xf]
        %v346 = vld [vmem:[#allocation5] sm:$0xf]
        %v347 = vld [vmem:[#allocation5 + $0x4] sm:$0xf]
        %v348 = vld [vmem:[#allocation5 + $0x8] sm:$0xf]
        %v349 = vld [vmem:[#allocation5 + $0xc] sm:$0xf]
        %v350 = vld [vmem:[#allocation5 + $0x10] sm:$0xf]
        %v351 = vld [vmem:[#allocation5 + $0x14] sm:$0xf]
        %v352 = vld [vmem:[#allocation5 + $0x18] sm:$0xf]
        %v353 = vld [vmem:[#allocation5 + $0x1c] sm:$0xf]
        %v354 = vld [vmem:[#allocation5 + $0x20] sm:$0xf]
        %v355 = vld [vmem:[#allocation5 + $0x24] sm:$0xf]
        %v356 = vld [vmem:[#allocation5 + $0x28] sm:$0xf]
        %v357 = vld [vmem:[#allocation5 + $0x2c] sm:$0xf]
        %v358 = vld [vmem:[#allocation5 + $0x30] sm:$0xf]
        %v359 = vld [vmem:[#allocation5 + $0x34] sm:$0xf]
        %v360 = vld [vmem:[#allocation5 + $0x38] sm:$0xf]
        %v361 = vld [vmem:[#allocation5 + $0x3c] sm:$0xf]
        %v362 = vld [vmem:[%s2] sm:$0x1]
        %v364 = vlaneseq
        %v365 = vshrl.u32 %v364, 7
        %v366 = vsub.s32 0, %v365
        %v367 = vrot.slane %v362, %v366
        %v371 = vunpack.c.l.b16 %v344
        %v372 = vunpack.c.l.b16 %v345
        %v373 = vpack.c.b16 %v372, %v371
        %v391 = vunpack.c.l.b16 %v346
        %v392 = vunpack.c.l.b16 %v347
        %v393 = vunpack.c.l.b16 %v348
        %v394 = vunpack.c.l.b16 %v349
        %v395 = vunpack.c.l.b16 %v350
        %v396 = vunpack.c.l.b16 %v351
        %v397 = vunpack.c.l.b16 %v352
        %v398 = vunpack.c.l.b16 %v353
        %v399 = vunpack.c.l.b16 %v354
        %v400 = vunpack.c.l.b16 %v355
        %v401 = vunpack.c.l.b16 %v356
        %v402 = vunpack.c.l.b16 %v357
        %v403 = vunpack.c.l.b16 %v358
        %v404 = vunpack.c.l.b16 %v359
        %v405 = vunpack.c.l.b16 %v360
        %v406 = vunpack.c.l.b16 %v361
        %v407 = vpack.c.b16 %v392, %v391
        %v408 = vpack.c.b16 %v394, %v393
        %v409 = vpack.c.b16 %v396, %v395
        %v410 = vpack.c.b16 %v398, %v397
        %v411 = vpack.c.b16 %v400, %v399
        %v412 = vpack.c.b16 %v402, %v401
        %v413 = vpack.c.b16 %v404, %v403
        %v414 = vpack.c.b16 %v406, %v405
        %423 = vmatprep.subr.bf16.mxu0 0
        %424 = vmatpush1.bf16.msra.mxu0 %v407
        %425 = vmatprep.subr.bf16.mxu0 0
        %426 = vmatpush1.bf16.msra.mxu0 %v408
        %427 = vmatprep.subr.bf16.mxu0 0
        %428 = vmatpush1.bf16.msra.mxu0 %v409
        %429 = vmatprep.subr.bf16.mxu0 0
        %430 = vmatpush1.bf16.msra.mxu0 %v410
        %431 = vmatprep.subr.bf16.mxu0 0
        %432 = vmatpush1.bf16.msra.mxu0 %v411
        %433 = vmatprep.subr.bf16.mxu0 0
        %434 = vmatpush1.bf16.msra.mxu0 %v412
        %435 = vmatprep.subr.bf16.mxu0 0
        %436 = vmatpush1.bf16.msra.mxu0 %v413
        %437 = vmatprep.subr.bf16.mxu0 0
        %438 = vmatpush1.bf16.msra.mxu0 %v414
        %439 = vmatprep.subr.bf16.mxu0 0
        %440 = vmatpush1.bf16.msra.mxu0 0
        %441 = vmatprep.subr.bf16.mxu0 0
        %442 = vmatpush1.bf16.msra.mxu0 0
        %443 = vmatprep.subr.bf16.mxu0 0
        %444 = vmatpush1.bf16.msra.mxu0 0
        %445 = vmatprep.subr.bf16.mxu0 0
        %446 = vmatpush1.bf16.msra.mxu0 0
        %447 = vmatprep.subr.bf16.mxu0 0
        %448 = vmatpush1.bf16.msra.mxu0 0
        %449 = vmatprep.subr.bf16.mxu0 0
        %450 = vmatpush1.bf16.msra.mxu0 0
        %451 = vmatprep.subr.bf16.mxu0 0
        %452 = vmatpush1.bf16.msra.mxu0 0
        %453 = vmatprep.subr.bf16.mxu0 0
        %454 = vmatpush1.bf16.msra.mxu0 0
        %455 = vmatprep.mubr.bf16.mxu0 0
        %456 = vmatmul.mubr.bf16.gmra.mrb[0].mxu0 %v373
        %v457 = vpop.f32.mrb[0].mxu0
        %v458 = vadd.f32 %v367, %v457
        %v459 = vpop.f32.mrb[0].mxu0
        %v460 = vpop.f32.mrb[0].mxu0
        %v461 = vadd.f32 %v367, %v460
        %v462 = vpop.f32.mrb[0].mxu0
        %463 = vdwg.mxu0
        %v464 = vmax.f32 %v458, 0.0
        %v465 = vmax.f32 %v461, 0.0
        %v466 = vpack.c.bf16 %v465, %v464
        %v467 = vld [vmem:[#allocation7] sm:$0xf]
        %v468 = vld [vmem:[#allocation7 + $0x4] sm:$0xf]
        %v469 = vld [vmem:[#allocation7 + $0x8] sm:$0xf]
        %v470 = vld [vmem:[#allocation7 + $0xc] sm:$0xf]
        %v471 = vld [vmem:[#allocation7 + $0x10] sm:$0xf]
        %v472 = vld [vmem:[#allocation7 + $0x14] sm:$0xf]
        %v473 = vld [vmem:[#allocation7 + $0x18] sm:$0xf]
        %v474 = vld [vmem:[#allocation7 + $0x1c] sm:$0xf]
        %v475 = vld [vmem:[#allocation7 + $0x20] sm:$0xf]
        %v476 = vld [vmem:[#allocation7 + $0x24] sm:$0xf]
        %v477 = vld [vmem:[#allocation7 + $0x28] sm:$0xf]
        %v478 = vld [vmem:[#allocation7 + $0x2c] sm:$0xf]
        %v479 = vld [vmem:[#allocation7 + $0x30] sm:$0xf]
        %v480 = vld [vmem:[#allocation7 + $0x34] sm:$0xf]
        %v481 = vld [vmem:[#allocation7 + $0x38] sm:$0xf]
        %v482 = vld [vmem:[#allocation7 + $0x3c] sm:$0xf]
        %v483 = vld [vmem:[%s4] sm:$0x1]
        %v485 = vlaneseq
        %v486 = vshrl.u32 %v485, 7
        %v487 = vsub.s32 0, %v486
        %v488 = vrot.slane %v483, %v487
        %v506 = vunpack.c.l.b16 %v467
        %v507 = vunpack.c.l.b16 %v468
        %v508 = vunpack.c.l.b16 %v469
        %v509 = vunpack.c.l.b16 %v470
        %v510 = vunpack.c.l.b16 %v471
        %v511 = vunpack.c.l.b16 %v472
        %v512 = vunpack.c.l.b16 %v473
        %v513 = vunpack.c.l.b16 %v474
        %v514 = vunpack.c.l.b16 %v475
        %v515 = vunpack.c.l.b16 %v476
        %v516 = vunpack.c.l.b16 %v477
        %v517 = vunpack.c.l.b16 %v478
        %v518 = vunpack.c.l.b16 %v479
        %v519 = vunpack.c.l.b16 %v480
        %v520 = vunpack.c.l.b16 %v481
        %v521 = vunpack.c.l.b16 %v482
        %v522 = vpack.c.b16 %v507, %v506
        %v523 = vpack.c.b16 %v509, %v508
        %v524 = vpack.c.b16 %v511, %v510
        %v525 = vpack.c.b16 %v513, %v512
        %v526 = vpack.c.b16 %v515, %v514
        %v527 = vpack.c.b16 %v517, %v516
        %v528 = vpack.c.b16 %v519, %v518
        %v529 = vpack.c.b16 %v521, %v520
        %538 = vmatprep.subr.bf16.mxu0 0
        %539 = vmatpush1.bf16.msra.mxu0 %v522
        %540 = vmatprep.subr.bf16.mxu0 0
        %541 = vmatpush1.bf16.msra.mxu0 %v523
        %542 = vmatprep.subr.bf16.mxu0 0
        %543 = vmatpush1.bf16.msra.mxu0 %v524
        %544 = vmatprep.subr.bf16.mxu0 0
        %545 = vmatpush1.bf16.msra.mxu0 %v525
        %546 = vmatprep.subr.bf16.mxu0 0
        %547 = vmatpush1.bf16.msra.mxu0 %v526
        %548 = vmatprep.subr.bf16.mxu0 0
        %549 = vmatpush1.bf16.msra.mxu0 %v527
        %550 = vmatprep.subr.bf16.mxu0 0
        %551 = vmatpush1.bf16.msra.mxu0 %v528
        %552 = vmatprep.subr.bf16.mxu0 0
        %553 = vmatpush1.bf16.msra.mxu0 %v529
        %554 = vmatprep.subr.bf16.mxu0 0
        %555 = vmatpush1.bf16.msra.mxu0 0
        %556 = vmatprep.subr.bf16.mxu0 0
        %557 = vmatpush1.bf16.msra.mxu0 0
        %558 = vmatprep.subr.bf16.mxu0 0
        %559 = vmatpush1.bf16.msra.mxu0 0
        %560 = vmatprep.subr.bf16.mxu0 0
        %561 = vmatpush1.bf16.msra.mxu0 0
        %562 = vmatprep.subr.bf16.mxu0 0
        %563 = vmatpush1.bf16.msra.mxu0 0
        %564 = vmatprep.subr.bf16.mxu0 0
        %565 = vmatpush1.bf16.msra.mxu0 0
        %566 = vmatprep.subr.bf16.mxu0 0
        %567 = vmatpush1.bf16.msra.mxu0 0
        %568 = vmatprep.subr.bf16.mxu0 0
        %569 = vmatpush1.bf16.msra.mxu0 0
        %570 = vmatprep.mubr.bf16.mxu0 0
        %571 = vmatmul.mubr.bf16.gmra.mrb[0].mxu0 %v466
        %v572 = vpop.f32.mrb[0].mxu0
        %v573 = vadd.f32 %v488, %v572
        %v574 = vpop.f32.mrb[0].mxu0
        %v575 = vpop.f32.mrb[0].mxu0
        %v576 = vadd.f32 %v488, %v575
        %v577 = vpop.f32.mrb[0].mxu0
        %578 = vdwg.mxu0
        %v579 = vmax.f32 %v573, 0.0
        %v580 = vmax.f32 %v576, 0.0
        %v581 = vpack.c.bf16 %v580, %v579
        %v582 = vld [vmem:[#allocation8] sm:$0xf]
        %v583 = vld [vmem:[#allocation8 + $0x4] sm:$0xf]
        %v584 = vld [vmem:[#allocation8 + $0x8] sm:$0xf]
        %v585 = vld [vmem:[#allocation8 + $0xc] sm:$0xf]
        %v586 = vld [vmem:[#allocation8 + $0x10] sm:$0xf]
        %v587 = vld [vmem:[#allocation8 + $0x14] sm:$0xf]
        %v588 = vld [vmem:[#allocation8 + $0x18] sm:$0xf]
        %v589 = vld [vmem:[#allocation8 + $0x1c] sm:$0xf]
        %v590 = vld [vmem:[#allocation8 + $0x20] sm:$0xf]
        %v591 = vld [vmem:[#allocation8 + $0x24] sm:$0xf]
        %v592 = vld [vmem:[#allocation8 + $0x28] sm:$0xf]
        %v593 = vld [vmem:[#allocation8 + $0x2c] sm:$0xf]
        %v594 = vld [vmem:[#allocation8 + $0x30] sm:$0xf]
        %v595 = vld [vmem:[#allocation8 + $0x34] sm:$0xf]
        %v596 = vld [vmem:[#allocation8 + $0x38] sm:$0xf]
        %v597 = vld [vmem:[#allocation8 + $0x3c] sm:$0xf]
        %v598 = vld [vmem:[%s6] sm:$0x1]
        %v600 = vlaneseq
        %v601 = vshrl.u32 %v600, 7
        %v602 = vsub.s32 0, %v601
        %v603 = vrot.slane %v598, %v602
        %v621 = vunpack.c.l.b16 %v582
        %v622 = vunpack.c.l.b16 %v583
        %v623 = vunpack.c.l.b16 %v584
        %v624 = vunpack.c.l.b16 %v585
        %v625 = vunpack.c.l.b16 %v586
        %v626 = vunpack.c.l.b16 %v587
        %v627 = vunpack.c.l.b16 %v588
        %v628 = vunpack.c.l.b16 %v589
        %v629 = vunpack.c.l.b16 %v590
        %v630 = vunpack.c.l.b16 %v591
        %v631 = vunpack.c.l.b16 %v592
        %v632 = vunpack.c.l.b16 %v593
        %v633 = vunpack.c.l.b16 %v594
        %v634 = vunpack.c.l.b16 %v595
        %v635 = vunpack.c.l.b16 %v596
        %v636 = vunpack.c.l.b16 %v597
        %v637 = vpack.c.b16 %v622, %v621
        %v638 = vpack.c.b16 %v624, %v623
        %v639 = vpack.c.b16 %v626, %v625
        %v640 = vpack.c.b16 %v628, %v627
        %v641 = vpack.c.b16 %v630, %v629
        %v642 = vpack.c.b16 %v632, %v631
        %v643 = vpack.c.b16 %v634, %v633
        %v644 = vpack.c.b16 %v636, %v635
        %653 = vmatprep.subr.bf16.mxu0 0
        %654 = vmatpush1.bf16.msra.mxu0 %v637
        %655 = vmatprep.subr.bf16.mxu0 0
        %656 = vmatpush1.bf16.msra.mxu0 %v638
        %657 = vmatprep.subr.bf16.mxu0 0
        %658 = vmatpush1.bf16.msra.mxu0 %v639
        %659 = vmatprep.subr.bf16.mxu0 0
        %660 = vmatpush1.bf16.msra.mxu0 %v640
        %661 = vmatprep.subr.bf16.mxu0 0
        %662 = vmatpush1.bf16.msra.mxu0 %v641
        %663 = vmatprep.subr.bf16.mxu0 0
        %664 = vmatpush1.bf16.msra.mxu0 %v642
        %665 = vmatprep.subr.bf16.mxu0 0
        %666 = vmatpush1.bf16.msra.mxu0 %v643
        %667 = vmatprep.subr.bf16.mxu0 0
        %668 = vmatpush1.bf16.msra.mxu0 %v644
        %669 = vmatprep.subr.bf16.mxu0 0
        %670 = vmatpush1.bf16.msra.mxu0 0
        %671 = vmatprep.subr.bf16.mxu0 0
        %672 = vmatpush1.bf16.msra.mxu0 0
        %673 = vmatprep.subr.bf16.mxu0 0
        %674 = vmatpush1.bf16.msra.mxu0 0
        %675 = vmatprep.subr.bf16.mxu0 0
        %676 = vmatpush1.bf16.msra.mxu0 0
        %677 = vmatprep.subr.bf16.mxu0 0
        %678 = vmatpush1.bf16.msra.mxu0 0
        %679 = vmatprep.subr.bf16.mxu0 0
        %680 = vmatpush1.bf16.msra.mxu0 0
        %681 = vmatprep.subr.bf16.mxu0 0
        %682 = vmatpush1.bf16.msra.mxu0 0
        %683 = vmatprep.subr.bf16.mxu0 0
        %684 = vmatpush1.bf16.msra.mxu0 0
        %685 = vmatprep.mubr.bf16.mxu0 0
        %686 = vmatmul.mubr.bf16.gmra.mrb[0].mxu0 %v581
        %v687 = vpop.f32.mrb[0].mxu0
        %v688 = vadd.f32 %v603, %v687
        %v689 = vpop.f32.mrb[0].mxu0
        %v690 = vpop.f32.mrb[0].mxu0
        %v691 = vadd.f32 %v603, %v690
        %v692 = vpop.f32.mrb[0].mxu0
        %693 = vdwg.mxu0
        %694 = vst [vmem:[%s340] sm:$0xff] %v688
        %695 = vst [vmem:[%s340 + $0x8] sm:$0xff] %v691
        %s696 = sand.u32 %s186, 1
        %s697 = scalar_lea.sflag [#allocation4], %s696
        %s698 = sand.u32 %s186, 1
        %s699 = smul.addr %s698, 16
        %s700 = scalar_lea.vmem [#allocation10], %s699
        // Predicated region
        $region65: #{tpu_custom_call.1} parent=47 // pred_check
          %p701 = pneg %p196
        $region66: #{tpu_custom_call.1} parent=47 // pred_check_branch
          %703 = sbr.rel (%p701) target = $region68
        $region67: #{tpu_custom_call.1} parent=47 // pred_region
          %s704 = smul.u32 2, %s26
          %s706 = ssub.s32 256, 256
          %707 = vsyncadd %s697, %s706
          %s708 = smul.addr %s704, 128
          %s709 = scalar_lea.hbm %s7, %s708
          %s710 = sshll.u32 %s700, 4
          %s711 = int_to_ptr.vmem [resolvable:$true] %s710
          %716 = dma.vmem_to_hbm [thread:$0]  %s711, 256, %s709, %s697, 128, 128, 8
        $region68: #{tpu_custom_call.1} parent=47 // pred_fallthru
          _
      $region48: #{tpu_custom_call.1} parent=5 // pred_fallthru
        _
      %p717 = scmp.le.s32.totalorder 2, %s21
      // Predicated region
      $region69: #{tpu_custom_call.1} parent=5 // pred_check
        %p718 = pneg %p717
      $region70: #{tpu_custom_call.1} parent=5 // pred_check_branch
        %720 = sbr.rel (%p718) target = $region72
      $region71: #{tpu_custom_call.1} parent=5 // pred_region
        %s721 = ssub.s32 %s21, 2
        // Predicated region
        $region73: #{tpu_custom_call.1} parent=71 // pred_check
          %p722 = pneg %p202
        $region74: #{tpu_custom_call.1} parent=71 // pred_check_branch
          %724 = sbr.rel (%p722) target = $region76
        $region75: #{tpu_custom_call.1} parent=71 // pred_region
          %s725 = sand.u32 %s187, 1
          %s726 = scalar_lea.sflag [#allocation4], %s725
          %s727 = sand.u32 %s187, 1
          %s728 = smul.addr %s727, 16
          %s729 = scalar_lea.vmem [#allocation10], %s728
          %730 = dma.done %s726, 256
        $region76: #{tpu_custom_call.1} parent=71 // pred_fallthru
          _
      $region72: #{tpu_custom_call.1} parent=5 // pred_fallthru
        _
    $region6: #{tpu_custom_call.1} parent=1 // loop_footer
      %s25 = sadd.s32 1, %s21
    $region7: #{tpu_custom_call.1} parent=1 // loop_footer_branch
      %20 = sbr.rel target = $region3
    $region8: #{tpu_custom_call.1} parent=1 // loop_exit
      _
    %731 = vsyncpa [#allocation3], 1
    %s732 = scalar_lea.sflag [#allocation3], 1
    %733 = vsyncpa %s732, 1
    %734 = vsyncpa [#allocation6], 1
    %735 = vsyncpa [#allocation9], 1
    %736 = vsyncpa [#allocation4], 1
    %s737 = scalar_lea.sflag [#allocation4], 1
    %738 = vsyncpa %s737, 1

</llo_original>
